<compile_context>
chip_gen: v7x
topology: tpu7x:2x2x1
jax: 0.10.0
libtpu: 0.0.40
codegen_flags: <defaults>
</compile_context>

<pallas_src>
import functools

import jax
import jax.numpy as jnp
from jax import lax
from jax.experimental import pallas as pl
from jax.experimental.pallas import tpu as pltpu

GESTURE_TO_VALUE_MAP = {
    'fist': 0, 'thumbs_down': 1, 'thumbs_up': 2, 'one': 3,
    'two': 4, 'three': 5, 'left': 6, 'right': 7,
}

INPUTS = 63
OUTPUTS = len(GESTURE_TO_VALUE_MAP)  # 8

_MIN_SPLIT_ROWS = 512  # rows per TensorCore worth splitting the grid for (v7x megacore)


def _round_up(x, m):
    return ((x + m - 1) // m) * m


def _cdiv(a, b):
    return -(-a // b)


# ---------------------------------------------------------------------------
# Kernel
# ---------------------------------------------------------------------------
def _mlp_kernel(x_ref, w_ref, b_ref, o_ref, *, num_layers, n_out):
    """Fused MLP forward for one (TILE_B, feat) batch tile.

    x_ref: (TILE_B, feat)  activations with their natural feature width (63)
    w_ref: (L, P, P)       zero-padded weight slab (f32 or bf16); layer i is w_ref[i]
    b_ref: (L, 1, P)       zero-padded bias slab (f32)
    o_ref: (TILE_B, n_out) dense probabilities, only the real 8 columns
    """
    tb, feat = x_ref.shape
    P = w_ref.shape[-1]
    cdt = w_ref.dtype  # matmul compute dtype (f32, or bf16 for the fast path)

    # Zero-pad the feature axis to the lane width in vregs (no HBM traffic).
    x = x_ref[...]
    if feat < P:
        x = jnp.concatenate([x, jnp.zeros((tb, P - feat), x.dtype)], axis=-1)

    h = x
    for i in range(num_layers):  # static unroll; every dot is (tb,P)x(P,P) on the MXU
        z = jnp.dot(h.astype(cdt), w_ref[i], preferred_element_type=jnp.float32)
        z = z + b_ref[i]                       # bias kept in f32
        h = jnp.maximum(z, 0.0) if i < num_layers - 1 else z

    # Row-wise softmax over the real logit columns; padded lanes -> prob 0.
    col = lax.broadcasted_iota(jnp.int32, h.shape, 1)
    h = jnp.where(col < n_out, h, -jnp.inf)
    m = jnp.max(h, axis=-1, keepdims=True)
    e = jnp.exp(h - m)                         # exp(-inf) == 0 on padded lanes
    s = jnp.sum(e, axis=-1, keepdims=True)
    inv = pl.reciprocal(s, approx=True)        # EUP slot
    inv = inv * (2.0 - s * inv)                # one Newton step -> ~1e-7 rel error
    p = e * inv
    o_ref[...] = p[:, :n_out].astype(o_ref.dtype)   # store only the 8 real columns


# ---------------------------------------------------------------------------
# Wrapper
# ---------------------------------------------------------------------------
def _choose_batch_tile(batch, tile_b):
    """Balanced batch tiles; give the second TensorCore work once batch is big."""
    n = max(1, _cdiv(batch, tile_b))
    if n == 1 and batch >= 2 * _MIN_SPLIT_ROWS:
        n = 2                     # v7x megacore: don't leave one core idle
    if n > 1 and n % 2 == 1:
        n += 1                    # even tile count -> balanced across 2 cores
    return _round_up(_cdiv(batch, n), 8)


@functools.partial(jax.jit, static_argnames=("num_layers", "tile_b"))
def mlp_forward(x, w_slab, b_slab, *, num_layers, tile_b=1024):
    batch, feat = x.shape
    L, P, _ = w_slab.shape
    assert L == num_layers and feat <= P

    tb = _choose_batch_tile(batch, tile_b)
    grid = _cdiv(batch, tb)       # ragged last tile is handled by Pallas (OOB rows dropped)

    return pl.pallas_call(
        functools.partial(_mlp_kernel, num_layers=num_layers, n_out=OUTPUTS),
        out_shape=jax.ShapeDtypeStruct((batch, OUTPUTS), jnp.float32),
        grid_spec=pltpu.PrefetchScalarGridSpec(
            num_scalar_prefetch=0,
            grid=(grid,),
            in_specs=[
                # Activations: natural 63-wide blocks, auto double-buffered.
                pl.BlockSpec((tb, feat), lambda i: (i, 0)),
                # Weight / bias slabs: constant index_map -> VMEM-resident.
                pl.BlockSpec((L, P, P), lambda i: (0, 0, 0)),
                pl.BlockSpec((L, 1, P), lambda i: (0, 0, 0)),
            ],
            # Dense (tb, 8) output block: 16x less writeback than (tb, 128).
            out_specs=pl.BlockSpec((tb, OUTPUTS), lambda i: (i, 0)),
        ),
        compiler_params=pltpu.CompilerParams(
            dimension_semantics=("parallel",),       # shard batch tiles across TCs (v7x)
            vmem_limit_bytes=32 * 1024 * 1024,       # portable headroom incl. v5e
        ),
    )(x.astype(jnp.float32), w_slab, b_slab)


# ---------------------------------------------------------------------------
# Parameters
# ---------------------------------------------------------------------------
def init_params(key, neurons, inputs=INPUTS, outputs=OUTPUTS):
    """PyTorch-Linear-style uniform init; weights stored as (in, out)."""
    dims = [inputs] + list(neurons) + [outputs]
    params = []
    for i in range(len(dims) - 1):
        fan_in, fan_out = dims[i], dims[i + 1]
        key, kw, kb = jax.random.split(key, 3)
        bound = 1.0 / float(fan_in) ** 0.5
        w = jax.random.uniform(kw, (fan_in, fan_out), jnp.float32, -bound, bound)
        b = jax.random.uniform(kb, (fan_out,), jnp.float32, -bound, bound)
        params.append((w, b))
    return params


def pack_params(params, dtype=jnp.float32, pad_to=128):
    """Pack per-layer (w, b) into zero-padded slabs: (L, P, P) dtype and (L, 1, P) f32."""
    dims = [params[0][0].shape[0]] + [w.shape[1] for w, _ in params]
    P = _round_up(max(dims), pad_to)
    L = len(params)
    w_slab = jnp.zeros((L, P, P), dtype)
    b_slab = jnp.zeros((L, 1, P), jnp.float32)
    for i, (w, b) in enumerate(params):
        fin, fout = w.shape
        w_slab = w_slab.at[i, :fin, :fout].set(w.astype(dtype))
        b_slab = b_slab.at[i, 0, :fout].set(b)
    return w_slab, b_slab


def mlp_forward_ref(x, params):
    """Pure-JAX reference mirroring the PyTorch module exactly."""
    h = x
    for i, (w, b) in enumerate(params):
        h = h @ w + b
        if i < len(params) - 1:
            h = jnp.maximum(h, 0.0)
    return jax.nn.softmax(h, axis=1)


if __name__ == "__main__":
    neurons = [32, 32]          # two hidden layers of 32 neurons each
    num_layers = len(neurons) + 1

    key = jax.random.PRNGKey(0)
    key, kx = jax.random.split(key)
    params = init_params(key, neurons)

    # --- f32 path, small batch (exact check) ---
    w32, b32 = pack_params(params, dtype=jnp.float32)
    batch = 8
    x = jax.random.normal(kx, (batch, INPUTS), dtype=jnp.float32)
    out = jax.block_until_ready(mlp_forward(x, w32, b32, num_layers=num_layers))
    ref = mlp_forward_ref(x, params)
    assert out.shape == (batch, OUTPUTS)
    assert jnp.allclose(jnp.sum(out, axis=1), 1.0, atol=1e-5)
    assert jnp.allclose(out, ref, atol=1e-5, rtol=1e-5)

    # --- multi-tile grid with a ragged last batch tile (exercises pipelining) ---
    batch2 = 200
    key, kx2 = jax.random.split(key)
    x2 = jax.random.normal(kx2, (batch2, INPUTS), dtype=jnp.float32)
    out2 = jax.block_until_ready(
        mlp_forward(x2, w32, b32, num_layers=num_layers, tile_b=64))
    ref2 = mlp_forward_ref(x2, params)
    assert out2.shape == (batch2, OUTPUTS)
    assert jnp.allclose(jnp.sum(out2, axis=1), 1.0, atol=1e-5)
    assert jnp.allclose(out2, ref2, atol=1e-5, rtol=1e-5)

    # --- bf16-weight fast path (fewer MXU passes; looser tolerance) ---
    wbf, bbf = pack_params(params, dtype=jnp.bfloat16)
    out_bf = jax.block_until_ready(mlp_forward(x2, wbf, bbf, num_layers=num_layers))
    assert out_bf.shape == (batch2, OUTPUTS)
    assert jnp.allclose(jnp.sum(out_bf, axis=1), 1.0, atol=1e-4)
    assert jnp.allclose(out_bf, ref2, atol=5e-2, rtol=5e-2)

    print("KERNEL_OK")
</pallas_src>

<mosaic_0001>
module attributes {stable_mosaic.version = 11 : i64} {
  func.func @_mlp_kernel(%arg0: i32, %arg1: memref<8x63xf32, #tpu.memory_space<vmem>>, %arg2: memref<3x128x128xf32, #tpu.memory_space<vmem>>, %arg3: memref<3x1x128xf32, #tpu.memory_space<vmem>>, %arg4: memref<8x8xf32, #tpu.memory_space<vmem>>) attributes {dimension_semantics = [#tpu.dimension_semantics<parallel>], iteration_bounds = array<i64: 1>, scalar_prefetch = 0 : i64, scratch_operands = 0 : i64, tpu.core_type = #tpu.core_type<tc>, window_params = [{transform_indices = @transform_0, window_bounds = array<i64: 8, 63>}, {pipeline_mode = #tpu.pipeline_mode<synchronous>, transform_indices = @transform_1, window_bounds = array<i64: 3, 128, 128>}, {pipeline_mode = #tpu.pipeline_mode<synchronous>, transform_indices = @transform_2, window_bounds = array<i64: 3, 1, 128>}, {transform_indices = @transform_3, window_bounds = array<i64: 8, 8>}]} {
    %c0 = arith.constant 0 : index
    %c0_0 = arith.constant 0 : index
    %0 = vector.load %arg1[%c0, %c0_0] : memref<8x63xf32, #tpu.memory_space<vmem>>, vector<8x63xf32>
    %cst = arith.constant 0.000000e+00 : f32
    %1 = vector.broadcast %cst : f32 to vector<8x65xf32>
    %2 = tpu.concatenate %0, %1 in 1 : vector<8x63xf32>, vector<8x65xf32> -> vector<8x128xf32>
    %c0_1 = arith.constant 0 : index
    %c0_2 = arith.constant 0 : index
    %c0_3 = arith.constant 0 : index
    %3 = vector.load %arg2[%c0_1, %c0_2, %c0_3] : memref<3x128x128xf32, #tpu.memory_space<vmem>>, vector<1x128x128xf32>
    %4 = vector.shape_cast %3 : vector<1x128x128xf32> to vector<128x128xf32>
    %cst_4 = arith.constant dense<0.000000e+00> : vector<8x128xf32>
    %5 = tpu.matmul %2, %4, %cst_4 {dimension_numbers = #tpu.dot_dimension_numbers<[1], [0], [0], [1], [0, 0, 1, 1], [], []>} : vector<8x128xf32>, vector<128x128xf32>, vector<8x128xf32> -> vector<8x128xf32>
    %c0_5 = arith.constant 0 : index
    %c0_6 = arith.constant 0 : index
    %c0_7 = arith.constant 0 : index
    %6 = vector.load %arg3[%c0_5, %c0_6, %c0_7] : memref<3x1x128xf32, #tpu.memory_space<vmem>>, vector<1x1x128xf32>
    %7 = vector.shape_cast %6 : vector<1x1x128xf32> to vector<1x128xf32>
    %8 = vector.broadcast %7 : vector<1x128xf32> to vector<8x128xf32>
    %9 = arith.addf %5, %8 : vector<8x128xf32>
    %cst_8 = arith.constant 0.000000e+00 : f32
    %10 = vector.broadcast %cst_8 : f32 to vector<8x128xf32>
    %11 = arith.maximumf %9, %10 : vector<8x128xf32>
    %c1 = arith.constant 1 : index
    %c0_9 = arith.constant 0 : index
    %c0_10 = arith.constant 0 : index
    %12 = vector.load %arg2[%c1, %c0_9, %c0_10] : memref<3x128x128xf32, #tpu.memory_space<vmem>>, vector<1x128x128xf32>
    %13 = vector.shape_cast %12 : vector<1x128x128xf32> to vector<128x128xf32>
    %cst_11 = arith.constant dense<0.000000e+00> : vector<8x128xf32>
    %14 = tpu.matmul %11, %13, %cst_11 {dimension_numbers = #tpu.dot_dimension_numbers<[1], [0], [0], [1], [0, 0, 1, 1], [], []>} : vector<8x128xf32>, vector<128x128xf32>, vector<8x128xf32> -> vector<8x128xf32>
    %c1_12 = arith.constant 1 : index
    %c0_13 = arith.constant 0 : index
    %c0_14 = arith.constant 0 : index
    %15 = vector.load %arg3[%c1_12, %c0_13, %c0_14] : memref<3x1x128xf32, #tpu.memory_space<vmem>>, vector<1x1x128xf32>
    %16 = vector.shape_cast %15 : vector<1x1x128xf32> to vector<1x128xf32>
    %17 = vector.broadcast %16 : vector<1x128xf32> to vector<8x128xf32>
    %18 = arith.addf %14, %17 : vector<8x128xf32>
    %cst_15 = arith.constant 0.000000e+00 : f32
    %19 = vector.broadcast %cst_15 : f32 to vector<8x128xf32>
    %20 = arith.maximumf %18, %19 : vector<8x128xf32>
    %c2 = arith.constant 2 : index
    %c0_16 = arith.constant 0 : index
    %c0_17 = arith.constant 0 : index
    %21 = vector.load %arg2[%c2, %c0_16, %c0_17] : memref<3x128x128xf32, #tpu.memory_space<vmem>>, vector<1x128x128xf32>
    %22 = vector.shape_cast %21 : vector<1x128x128xf32> to vector<128x128xf32>
    %cst_18 = arith.constant dense<0.000000e+00> : vector<8x128xf32>
    %23 = tpu.matmul %20, %22, %cst_18 {dimension_numbers = #tpu.dot_dimension_numbers<[1], [0], [0], [1], [0, 0, 1, 1], [], []>} : vector<8x128xf32>, vector<128x128xf32>, vector<8x128xf32> -> vector<8x128xf32>
    %c2_19 = arith.constant 2 : index
    %c0_20 = arith.constant 0 : index
    %c0_21 = arith.constant 0 : index
    %24 = vector.load %arg3[%c2_19, %c0_20, %c0_21] : memref<3x1x128xf32, #tpu.memory_space<vmem>>, vector<1x1x128xf32>
    %25 = vector.shape_cast %24 : vector<1x1x128xf32> to vector<1x128xf32>
    %26 = vector.broadcast %25 : vector<1x128xf32> to vector<8x128xf32>
    %27 = arith.addf %23, %26 : vector<8x128xf32>
    %28 = tpu.iota {dimensions = array<i32: 1>} : vector<8x128xi32>
    %c8_i32 = arith.constant 8 : i32
    %29 = vector.broadcast %c8_i32 : i32 to vector<8x128xi32>
    %30 = arith.cmpi slt, %28, %29 : vector<8x128xi32>
    %cst_22 = arith.constant 0xFF800000 : f32
    %31 = vector.broadcast %cst_22 : f32 to vector<8x128xf32>
    %32 = arith.select %30, %27, %31 : vector<8x128xi1>, vector<8x128xf32>
    %cst_23 = arith.constant dense<0xFF800000> : vector<8xf32>
    %33 = vector.multi_reduction <maximumf>, %32, %cst_23 [1] : vector<8x128xf32> to vector<8xf32>
    %34 = vector.shape_cast %33 : vector<8xf32> to vector<8x1xf32>
    %35 = vector.broadcast %34 : vector<8x1xf32> to vector<8x128xf32>
    %36 = arith.subf %32, %35 : vector<8x128xf32>
    %37 = math.exp %36 : vector<8x128xf32>
    %cst_24 = arith.constant dense<0.000000e+00> : vector<8xf32>
    %38 = vector.multi_reduction <add>, %37, %cst_24 [1] : vector<8x128xf32> to vector<8xf32>
    %39 = vector.shape_cast %38 : vector<8xf32> to vector<8x1xf32>
    %40 = tpu.reciprocal %39 {approx = true} : vector<8x1xf32> -> vector<8x1xf32>
    %41 = arith.mulf %39, %40 : vector<8x1xf32>
    %cst_25 = arith.constant 2.000000e+00 : f32
    %42 = vector.broadcast %cst_25 : f32 to vector<8x1xf32>
    %43 = arith.subf %42, %41 : vector<8x1xf32>
    %44 = arith.mulf %40, %43 : vector<8x1xf32>
    %45 = vector.broadcast %44 : vector<8x1xf32> to vector<8x128xf32>
    %46 = arith.mulf %37, %45 : vector<8x128xf32>
    %47 = vector.extract_strided_slice %46 {offsets = [0, 0], sizes = [8, 8], strides = [1, 1]} : vector<8x128xf32> to vector<8x8xf32>
    %c0_26 = arith.constant 0 : index
    %c0_27 = arith.constant 0 : index
    %48 = vector.load %arg4[%c0_26, %c0_27] : memref<8x8xf32, #tpu.memory_space<vmem>>, vector<8x8xf32>
    tpu.vector_store %arg4[%c0_26, %c0_27], %47 {strides = array<i32>} : memref<8x8xf32, #tpu.memory_space<vmem>>, vector<8x8xf32>,
    return
  }
  func.func @transform_0(%arg0: i32) -> (i32, i32) {
    %c0_i32 = arith.constant 0 : i32
    %c0_i32_0 = arith.constant 0 : i32
    return %arg0, %c0_i32 : i32, i32
  }
  func.func @transform_1(%arg0: i32) -> (i32, i32, i32) {
    %c0_i32 = arith.constant 0 : i32
    %c0_i32_0 = arith.constant 0 : i32
    %c0_i32_1 = arith.constant 0 : i32
    %c0_i32_2 = arith.constant 0 : i32
    return %c0_i32, %c0_i32_0, %c0_i32_1 : i32, i32, i32
  }
  func.func @transform_2(%arg0: i32) -> (i32, i32, i32) {
    %c0_i32 = arith.constant 0 : i32
    %c0_i32_0 = arith.constant 0 : i32
    %c0_i32_1 = arith.constant 0 : i32
    %c0_i32_2 = arith.constant 0 : i32
    return %c0_i32, %c0_i32_0, %c0_i32_1 : i32, i32, i32
  }
  func.func @transform_3(%arg0: i32) -> (i32, i32) {
    %c0_i32 = arith.constant 0 : i32
    %c0_i32_0 = arith.constant 0 : i32
    return %arg0, %c0_i32 : i32, i32
  }
}

</mosaic_0001>

<llo_original>
// kernel: mlp_forward.1
$region0: #{mlp_forward.1}
  #allocation0 [shape = 'u32[]', space=smem, size = 0x4, offset = 0x4, fixed_abs, tag = 'smem constant byte address 0x4 - core index']
  #allocation1 [shape = 'u32[144,128]{1,0:T(1,128)}', space=vmem, size = 0x12000, scoped, tag = 'internal scratch']
  %s0 = inlined_call_operand.hbm [shape: f32[8,63], index: 0, kind: input, shape index: {}]
  %s1 = inlined_call_operand.hbm [shape: f32[3,128,128], index: 1, kind: input, shape index: {}]
  %s2 = inlined_call_operand.vmem [shape: f32[3,1,128], index: 2, kind: input, shape index: {}]
  %s3 = inlined_call_operand.hbm [shape: f32[8,8], index: 3, kind: output, shape index: {}]
  %s4 = sld [smem:[#allocation0]]
  $region30: #{mlp_forward.1} parent=0
    _
  %s6 = ssub.s32 1, %s4
  %s7 = scalar_select 0, %s6, %s4
  $region1: #{mlp_forward.1} parent=0
    #allocation2 [shape = 'u8[4096]{0}', space=vmem, size = 0x1000, scoped, tag = 'input window, operand 0, single buffered']
    #allocation3 [shape = 's32[1]{0}', space=sflag, size = 0x4, scoped, tag = 'scoped memory for mlp_forward.1']
    #allocation4 [shape = 's32[1]{0}', space=sflag, size = 0x4, scoped, tag = 'scoped memory for mlp_forward.1']
    #allocation5 [shape = 'u8[196608]{0}', space=vmem, size = 0x30000, scoped, tag = 'input window, operand 1, single buffered']
    #allocation6 [shape = 's32[1]{0}', space=sflag, size = 0x4, scoped, tag = 'scoped memory for mlp_forward.1']
    #allocation7 [shape = 'u8[4096]{0}', space=vmem, size = 0x1000, scoped, tag = 'output window, operand 0, single buffered']
    %8 = vsyncpa [#allocation3], 0
    %9 = vsyncpa [#allocation6], 0
    %10 = vsyncpa [#allocation4], 0
    // Predicated region
    $region2: #{mlp_forward.1} parent=1 // pred_check
      _
    $region3: #{mlp_forward.1} parent=1 // pred_check_branch
      %12 = sbr.rel (0) target = $region5
    $region4: #{mlp_forward.1} parent=1 // pred_region
      %s14 = ssub.s32 128, 128
      %15 = vsyncadd [#allocation3], %s14
      %s17 = sshll.u32 [#allocation2], 4
      %s18 = int_to_ptr.vmem [resolvable:$true] %s17
      %20 = dma.hbm_to_vmem [thread:$0]  %s0, 128, %s18, [#allocation3]
    $region5: #{mlp_forward.1} parent=1 // pred_fallthru
      _
    // Predicated region
    $region6: #{mlp_forward.1} parent=1 // pred_check
      _
    $region7: #{mlp_forward.1} parent=1 // pred_check_branch
      %22 = sbr.rel (0) target = $region9
    $region8: #{mlp_forward.1} parent=1 // pred_region
      %s24 = ssub.s32 6144, 6144
      %25 = vsyncadd [#allocation6], %s24
      %s26 = sshll.u32 [#allocation5], 4
      %s27 = int_to_ptr.vmem [resolvable:$true] %s26
      %32 = dma.hbm_to_vmem [thread:$0]  %s1, 6144, %s27, [#allocation6], 128, 128, 8
    $region9: #{mlp_forward.1} parent=1 // pred_fallthru
      _
    // Predicated region
    $region10: #{mlp_forward.1} parent=1 // pred_check
      _
    $region11: #{mlp_forward.1} parent=1 // pred_check_branch
      %34 = sbr.rel (0) target = $region13
    $region12: #{mlp_forward.1} parent=1 // pred_region
      _
    $region13: #{mlp_forward.1} parent=1 // pred_fallthru
      _
    // Predicated region
    $region14: #{mlp_forward.1} parent=1 // pred_check
      _
    $region15: #{mlp_forward.1} parent=1 // pred_check_branch
      %36 = sbr.rel (0) target = $region17
    $region16: #{mlp_forward.1} parent=1 // pred_region
      %37 = dma.done [#allocation3], 128
    $region17: #{mlp_forward.1} parent=1 // pred_fallthru
      _
    // Predicated region
    $region18: #{mlp_forward.1} parent=1 // pred_check
      _
    $region19: #{mlp_forward.1} parent=1 // pred_check_branch
      %39 = sbr.rel (0) target = $region21
    $region20: #{mlp_forward.1} parent=1 // pred_region
      %40 = dma.done [#allocation6], 6144
    $region21: #{mlp_forward.1} parent=1 // pred_fallthru
      _
    %v41 = vld [vmem:[#allocation2] sm:$0xff]
    %vm42 = vcmask 515072
    %v43 = vsel %vm42, %v41, 0.0
    %v44 = vld [vmem:[#allocation5] sm:$0xff]
    %v45 = vld [vmem:[#allocation5 + $0x8] sm:$0xff]
    %v46 = vld [vmem:[#allocation5 + $0x10] sm:$0xff]
    %v47 = vld [vmem:[#allocation5 + $0x18] sm:$0xff]
    %v48 = vld [vmem:[#allocation5 + $0x20] sm:$0xff]
    %v49 = vld [vmem:[#allocation5 + $0x28] sm:$0xff]
    %v50 = vld [vmem:[#allocation5 + $0x30] sm:$0xff]
    %v51 = vld [vmem:[#allocation5 + $0x38] sm:$0xff]
    %v52 = vld [vmem:[#allocation5 + $0x40] sm:$0xff]
    %v53 = vld [vmem:[#allocation5 + $0x48] sm:$0xff]
    %v54 = vld [vmem:[#allocation5 + $0x50] sm:$0xff]
    %v55 = vld [vmem:[#allocation5 + $0x58] sm:$0xff]
    %v56 = vld [vmem:[#allocation5 + $0x60] sm:$0xff]
    %v57 = vld [vmem:[#allocation5 + $0x68] sm:$0xff]
    %v58 = vld [vmem:[#allocation5 + $0x70] sm:$0xff]
    %v59 = vld [vmem:[#allocation5 + $0x78] sm:$0xff]
    %v60 = vld [vmem:[%s2] sm:$0x1]
    %v62 = vlaneseq
    %v63 = vshrl.u32 %v62, 7
    %v64 = vsub.s32 0, %v63
    %v65 = vrot.slane %v60, %v64
    %67 = vmatprep.subr.mxu0 0.0
    %68 = vmatpush1.msra.mxu0 %v44
    %69 = vmatprep.subr.mxu0 0.0
    %70 = vmatpush1.msra.mxu0 %v45
    %71 = vmatprep.subr.mxu0 0.0
    %72 = vmatpush1.msra.mxu0 %v46
    %73 = vmatprep.subr.mxu0 0.0
    %74 = vmatpush1.msra.mxu0 %v47
    %75 = vmatprep.subr.mxu0 0.0
    %76 = vmatpush1.msra.mxu0 %v48
    %77 = vmatprep.subr.mxu0 0.0
    %78 = vmatpush1.msra.mxu0 %v49
    %79 = vmatprep.subr.mxu0 0.0
    %80 = vmatpush1.msra.mxu0 %v50
    %81 = vmatprep.subr.mxu0 0.0
    %82 = vmatpush1.msra.mxu0 %v51
    %83 = vmatprep.subr.mxu0 0.0
    %84 = vmatpush1.msra.mxu0 %v52
    %85 = vmatprep.subr.mxu0 0.0
    %86 = vmatpush1.msra.mxu0 %v53
    %87 = vmatprep.subr.mxu0 0.0
    %88 = vmatpush1.msra.mxu0 %v54
    %89 = vmatprep.subr.mxu0 0.0
    %90 = vmatpush1.msra.mxu0 %v55
    %91 = vmatprep.subr.mxu0 0.0
    %92 = vmatpush1.msra.mxu0 %v56
    %93 = vmatprep.subr.mxu0 0.0
    %94 = vmatpush1.msra.mxu0 %v57
    %95 = vmatprep.subr.mxu0 0.0
    %96 = vmatpush1.msra.mxu0 %v58
    %97 = vmatprep.subr.mxu0 0.0
    %98 = vmatpush1.msra.mxu0 %v59
    %99 = vmatprep.subr.mxu0 0.0
    %100 = vmatpush1.msra.mxu0 0.0
    %101 = vmatprep.subr.mxu0 0.0
    %102 = vmatpush1.msra.mxu0 0.0
    %103 = vmatprep.subr.mxu0 0.0
    %104 = vmatpush1.msra.mxu0 0.0
    %105 = vmatprep.subr.mxu0 0.0
    %106 = vmatpush1.msra.mxu0 0.0
    %107 = vmatprep.subr.mxu0 0.0
    %108 = vmatpush1.msra.mxu0 0.0
    %109 = vmatprep.subr.mxu0 0.0
    %110 = vmatpush1.msra.mxu0 0.0
    %111 = vmatprep.subr.mxu0 0.0
    %112 = vmatpush1.msra.mxu0 0.0
    %113 = vmatprep.subr.mxu0 0.0
    %114 = vmatpush1.msra.mxu0 0.0
    %115 = vmatprep.subr.mxu0 0.0
    %116 = vmatpush1.msra.mxu0 0.0
    %117 = vmatprep.subr.mxu0 0.0
    %118 = vmatpush1.msra.mxu0 0.0
    %119 = vmatprep.subr.mxu0 0.0
    %120 = vmatpush1.msra.mxu0 0.0
    %121 = vmatprep.subr.mxu0 0.0
    %122 = vmatpush1.msra.mxu0 0.0
    %123 = vmatprep.subr.mxu0 0.0
    %124 = vmatpush1.msra.mxu0 0.0
    %125 = vmatprep.subr.mxu0 0.0
    %126 = vmatpush1.msra.mxu0 0.0
    %127 = vmatprep.subr.mxu0 0.0
    %128 = vmatpush1.msra.mxu0 0.0
    %129 = vmatprep.subr.mxu0 0.0
    %130 = vmatpush1.msra.mxu0 0.0
    %131 = vmatprep.mubr.f32.mxu0 0.0
    %132 = vmatmul.mubr.f32.gmra.mrb[0].mxu0 %v43
    %v133 = vpop.f32.mrb[0].mxu0
    %v134 = vadd.f32 %v65, %v133
    %v135 = vpop.f32.mrb[0].mxu0
    %136 = vdwg.mxu0
    %v137 = vmax.f32 %v134, 0.0
    %s138 = scalar_lea.vmem [#allocation5], 128
    %v139 = vld [vmem:[%s138] sm:$0xff]
    %v140 = vld [vmem:[%s138 + $0x8] sm:$0xff]
    %v141 = vld [vmem:[%s138 + $0x10] sm:$0xff]
    %v142 = vld [vmem:[%s138 + $0x18] sm:$0xff]
    %v143 = vld [vmem:[%s138 + $0x20] sm:$0xff]
    %v144 = vld [vmem:[%s138 + $0x28] sm:$0xff]
    %v145 = vld [vmem:[%s138 + $0x30] sm:$0xff]
    %v146 = vld [vmem:[%s138 + $0x38] sm:$0xff]
    %v147 = vld [vmem:[%s138 + $0x40] sm:$0xff]
    %v148 = vld [vmem:[%s138 + $0x48] sm:$0xff]
    %v149 = vld [vmem:[%s138 + $0x50] sm:$0xff]
    %v150 = vld [vmem:[%s138 + $0x58] sm:$0xff]
    %v151 = vld [vmem:[%s138 + $0x60] sm:$0xff]
    %v152 = vld [vmem:[%s138 + $0x68] sm:$0xff]
    %v153 = vld [vmem:[%s138 + $0x70] sm:$0xff]
    %v154 = vld [vmem:[%s138 + $0x78] sm:$0xff]
    %s155 = scalar_lea.vmem %s2, 1
    %v156 = vld [vmem:[%s155] sm:$0x1]
    %v158 = vlaneseq
    %v159 = vshrl.u32 %v158, 7
    %v160 = vsub.s32 0, %v159
    %v161 = vrot.slane %v156, %v160
    %163 = vmatprep.subr.mxu0 0.0
    %164 = vmatpush1.msra.mxu0 %v139
    %165 = vmatprep.subr.mxu0 0.0
    %166 = vmatpush1.msra.mxu0 %v140
    %167 = vmatprep.subr.mxu0 0.0
    %168 = vmatpush1.msra.mxu0 %v141
    %169 = vmatprep.subr.mxu0 0.0
    %170 = vmatpush1.msra.mxu0 %v142
    %171 = vmatprep.subr.mxu0 0.0
    %172 = vmatpush1.msra.mxu0 %v143
    %173 = vmatprep.subr.mxu0 0.0
    %174 = vmatpush1.msra.mxu0 %v144
    %175 = vmatprep.subr.mxu0 0.0
    %176 = vmatpush1.msra.mxu0 %v145
    %177 = vmatprep.subr.mxu0 0.0
    %178 = vmatpush1.msra.mxu0 %v146
    %179 = vmatprep.subr.mxu0 0.0
    %180 = vmatpush1.msra.mxu0 %v147
    %181 = vmatprep.subr.mxu0 0.0
    %182 = vmatpush1.msra.mxu0 %v148
    %183 = vmatprep.subr.mxu0 0.0
    %184 = vmatpush1.msra.mxu0 %v149
    %185 = vmatprep.subr.mxu0 0.0
    %186 = vmatpush1.msra.mxu0 %v150
    %187 = vmatprep.subr.mxu0 0.0
    %188 = vmatpush1.msra.mxu0 %v151
    %189 = vmatprep.subr.mxu0 0.0
    %190 = vmatpush1.msra.mxu0 %v152
    %191 = vmatprep.subr.mxu0 0.0
    %192 = vmatpush1.msra.mxu0 %v153
    %193 = vmatprep.subr.mxu0 0.0
    %194 = vmatpush1.msra.mxu0 %v154
    %195 = vmatprep.subr.mxu0 0.0
    %196 = vmatpush1.msra.mxu0 0.0
    %197 = vmatprep.subr.mxu0 0.0
    %198 = vmatpush1.msra.mxu0 0.0
    %199 = vmatprep.subr.mxu0 0.0
    %200 = vmatpush1.msra.mxu0 0.0
    %201 = vmatprep.subr.mxu0 0.0
    %202 = vmatpush1.msra.mxu0 0.0
    %203 = vmatprep.subr.mxu0 0.0
    %204 = vmatpush1.msra.mxu0 0.0
    %205 = vmatprep.subr.mxu0 0.0
    %206 = vmatpush1.msra.mxu0 0.0
    %207 = vmatprep.subr.mxu0 0.0
    %208 = vmatpush1.msra.mxu0 0.0
    %209 = vmatprep.subr.mxu0 0.0
    %210 = vmatpush1.msra.mxu0 0.0
    %211 = vmatprep.subr.mxu0 0.0
    %212 = vmatpush1.msra.mxu0 0.0
    %213 = vmatprep.subr.mxu0 0.0
    %214 = vmatpush1.msra.mxu0 0.0
    %215 = vmatprep.subr.mxu0 0.0
    %216 = vmatpush1.msra.mxu0 0.0
    %217 = vmatprep.subr.mxu0 0.0
    %218 = vmatpush1.msra.mxu0 0.0
    %219 = vmatprep.subr.mxu0 0.0
    %220 = vmatpush1.msra.mxu0 0.0
    %221 = vmatprep.subr.mxu0 0.0
    %222 = vmatpush1.msra.mxu0 0.0
    %223 = vmatprep.subr.mxu0 0.0
    %224 = vmatpush1.msra.mxu0 0.0
    %225 = vmatprep.subr.mxu0 0.0
    %226 = vmatpush1.msra.mxu0 0.0
    %227 = vmatprep.mubr.f32.mxu0 0.0
    %228 = vmatmul.mubr.f32.gmra.mrb[0].mxu0 %v137
    %v229 = vpop.f32.mrb[0].mxu0
    %v230 = vadd.f32 %v161, %v229
    %v231 = vpop.f32.mrb[0].mxu0
    %232 = vdwg.mxu0
    %v233 = vmax.f32 %v230, 0.0
    %s234 = scalar_lea.vmem [#allocation5], 256
    %v235 = vld [vmem:[%s234] sm:$0xff]
    %v236 = vld [vmem:[%s234 + $0x8] sm:$0xff]
    %v237 = vld [vmem:[%s234 + $0x10] sm:$0xff]
    %v238 = vld [vmem:[%s234 + $0x18] sm:$0xff]
    %v239 = vld [vmem:[%s234 + $0x20] sm:$0xff]
    %v240 = vld [vmem:[%s234 + $0x28] sm:$0xff]
    %v241 = vld [vmem:[%s234 + $0x30] sm:$0xff]
    %v242 = vld [vmem:[%s234 + $0x38] sm:$0xff]
    %v243 = vld [vmem:[%s234 + $0x40] sm:$0xff]
    %v244 = vld [vmem:[%s234 + $0x48] sm:$0xff]
    %v245 = vld [vmem:[%s234 + $0x50] sm:$0xff]
    %v246 = vld [vmem:[%s234 + $0x58] sm:$0xff]
    %v247 = vld [vmem:[%s234 + $0x60] sm:$0xff]
    %v248 = vld [vmem:[%s234 + $0x68] sm:$0xff]
    %v249 = vld [vmem:[%s234 + $0x70] sm:$0xff]
    %v250 = vld [vmem:[%s234 + $0x78] sm:$0xff]
    %s251 = scalar_lea.vmem %s2, 2
    %v252 = vld [vmem:[%s251] sm:$0x1]
    %v254 = vlaneseq
    %v255 = vshrl.u32 %v254, 7
    %v256 = vsub.s32 0, %v255
    %v257 = vrot.slane %v252, %v256
    %259 = vmatprep.subr.mxu0 0.0
    %260 = vmatpush1.msra.mxu0 %v235
    %261 = vmatprep.subr.mxu0 0.0
    %262 = vmatpush1.msra.mxu0 %v236
    %263 = vmatprep.subr.mxu0 0.0
    %264 = vmatpush1.msra.mxu0 %v237
    %265 = vmatprep.subr.mxu0 0.0
    %266 = vmatpush1.msra.mxu0 %v238
    %267 = vmatprep.subr.mxu0 0.0
    %268 = vmatpush1.msra.mxu0 %v239
    %269 = vmatprep.subr.mxu0 0.0
    %270 = vmatpush1.msra.mxu0 %v240
    %271 = vmatprep.subr.mxu0 0.0
    %272 = vmatpush1.msra.mxu0 %v241
    %273 = vmatprep.subr.mxu0 0.0
    %274 = vmatpush1.msra.mxu0 %v242
    %275 = vmatprep.subr.mxu0 0.0
    %276 = vmatpush1.msra.mxu0 %v243
    %277 = vmatprep.subr.mxu0 0.0
    %278 = vmatpush1.msra.mxu0 %v244
    %279 = vmatprep.subr.mxu0 0.0
    %280 = vmatpush1.msra.mxu0 %v245
    %281 = vmatprep.subr.mxu0 0.0
    %282 = vmatpush1.msra.mxu0 %v246
    %283 = vmatprep.subr.mxu0 0.0
    %284 = vmatpush1.msra.mxu0 %v247
    %285 = vmatprep.subr.mxu0 0.0
    %286 = vmatpush1.msra.mxu0 %v248
    %287 = vmatprep.subr.mxu0 0.0
    %288 = vmatpush1.msra.mxu0 %v249
    %289 = vmatprep.subr.mxu0 0.0
    %290 = vmatpush1.msra.mxu0 %v250
    %291 = vmatprep.subr.mxu0 0.0
    %292 = vmatpush1.msra.mxu0 0.0
    %293 = vmatprep.subr.mxu0 0.0
    %294 = vmatpush1.msra.mxu0 0.0
    %295 = vmatprep.subr.mxu0 0.0
    %296 = vmatpush1.msra.mxu0 0.0
    %297 = vmatprep.subr.mxu0 0.0
    %298 = vmatpush1.msra.mxu0 0.0
    %299 = vmatprep.subr.mxu0 0.0
    %300 = vmatpush1.msra.mxu0 0.0
    %301 = vmatprep.subr.mxu0 0.0
    %302 = vmatpush1.msra.mxu0 0.0
    %303 = vmatprep.subr.mxu0 0.0
    %304 = vmatpush1.msra.mxu0 0.0
    %305 = vmatprep.subr.mxu0 0.0
    %306 = vmatpush1.msra.mxu0 0.0
    %307 = vmatprep.subr.mxu0 0.0
    %308 = vmatpush1.msra.mxu0 0.0
    %309 = vmatprep.subr.mxu0 0.0
    %310 = vmatpush1.msra.mxu0 0.0
    %311 = vmatprep.subr.mxu0 0.0
    %312 = vmatpush1.msra.mxu0 0.0
    %313 = vmatprep.subr.mxu0 0.0
    %314 = vmatpush1.msra.mxu0 0.0
    %315 = vmatprep.subr.mxu0 0.0
    %316 = vmatpush1.msra.mxu0 0.0
    %317 = vmatprep.subr.mxu0 0.0
    %318 = vmatpush1.msra.mxu0 0.0
    %319 = vmatprep.subr.mxu0 0.0
    %320 = vmatpush1.msra.mxu0 0.0
    %321 = vmatprep.subr.mxu0 0.0
    %322 = vmatpush1.msra.mxu0 0.0
    %323 = vmatprep.mubr.f32.mxu0 0.0
    %324 = vmatmul.mubr.f32.gmra.mrb[0].mxu0 %v233
    %v325 = vpop.f32.mrb[0].mxu0
    %v326 = vadd.f32 %v257, %v325
    %v327 = vpop.f32.mrb[0].mxu0
    %328 = vdwg.mxu0
    %v329 = vlaneseq
    %v330 = vand.u32 %v329, 127
    %vm331 = vcmp.lt.s32.totalorder %v330, 8
    %v332 = vsel %vm331, %v326, -inf
    %333 = vmax.xlane.f32.xlu0 %v332
    %v334 = vpop.xlane.xlu0 %333
    %v335 = vsub.f32 %v332, %v334
    %v336 = vmul.f32 %v335, 1.442695
    %v337 = vpow.pop %v336
    %338 = vadd.xlane.f32.xlu0 %v337
    %v339 = vpop.xlane.xlu0 %338
    %v340 = vrcp.pop %v339
    %v341 = vmul.f32 %v339, %v340
    %v342 = vsub.f32 2.0, %v341
    %v343 = vmul.f32 %v340, %v342
    %v344 = vmul.f32 %v337, %v343
    %vm345 = vcmask 64512
    %346 = vst.msk [vmem:[#allocation7] sm:$0xff] %vm345, %v344
    // Predicated region
    $region22: #{mlp_forward.1} parent=1 // pred_check
      _
    $region23: #{mlp_forward.1} parent=1 // pred_check_branch
      %348 = sbr.rel (0) target = $region25
    $region24: #{mlp_forward.1} parent=1 // pred_region
      %s350 = ssub.s32 128, 128
      %351 = vsyncadd [#allocation4], %s350
      %s353 = sshll.u32 [#allocation7], 4
      %s354 = int_to_ptr.vmem [resolvable:$true] %s353
      %356 = dma.vmem_to_hbm [thread:$0]  %s354, 128, %s3, [#allocation4]
    $region25: #{mlp_forward.1} parent=1 // pred_fallthru
      _
    // Predicated region
    $region26: #{mlp_forward.1} parent=1 // pred_check
      _
    $region27: #{mlp_forward.1} parent=1 // pred_check_branch
      %358 = sbr.rel (0) target = $region29
    $region28: #{mlp_forward.1} parent=1 // pred_region
      %359 = dma.done [#allocation4], 128
    $region29: #{mlp_forward.1} parent=1 // pred_fallthru
      _
    %360 = vsyncpa [#allocation3], 1
    %361 = vsyncpa [#allocation6], 1
    %362 = vsyncpa [#allocation4], 1

</llo_original>
